<compile_context>
chip_gen: v5e
topology: v5e:2x2
jax: 0.10.0
libtpu: 0.0.40
codegen_flags: <defaults>
</compile_context>

<pallas_src>
import jax
import jax.numpy as jnp
import numpy as np
from jax.experimental import pallas as pl
from jax.experimental.pallas import tpu as pltpu


def _dag_affine_kernel(x_ref, w_ref, b_ref, o_ref):
    # x_ref: (TN, C*L)   leaf features for this batch tile (native NCL reshape)
    # w_ref: (C*L, C*M)  composed affine map (identity rows carry the leaves)
    # b_ref: (1,  C*M)   composed bias (zero on leaf rows)
    # o_ref: (TN, C*M)   full output tile (leaves + all DAG nodes)
    o_ref[...] = (jnp.dot(x_ref[...], w_ref[...],
                          preferred_element_type=jnp.float32)
                  + b_ref[...]).astype(o_ref.dtype)


def _round_up(a, b):
    return (a + b - 1) // b * b


def _choose_batch_tile(n, d_in, d_out, vmem_block_budget=24 * 1024 * 1024):
    """Pick the batch tile TN (multiple of 8) and the padded batch size."""
    # Bytes per batch row held in VMEM by the double-buffered in/out blocks.
    row_bytes = 2 * (d_in + d_out) * 4
    cap = max(8, (vmem_block_budget // max(row_bytes, 1)) // 8 * 8)
    n8 = _round_up(n, 8)
    # Target >= 4 grid steps: DMA/compute overlap + both v7x TensorCores.
    want = max(8, _round_up((n8 + 3) // 4, 8))
    tn = min(cap, want, 1024)
    n_pad = _round_up(n8, tn)
    return tn, n_pad


def _compose_affine(dag, weights, biases, C, L):
    """Fold the whole DAG into out_flat = x_flat @ W + b (tiny trace-time jnp ops).

    x_flat index = c_in*L + l  (free reshape of (N,C,L));
    out_flat index = c_out*M + m (free reshape to (N,C,M))."""
    node_list = sorted(dag.items())
    K = len(node_list)
    M = L + K
    D_in = C * L

    A_list, d_list = [], []
    # Leaves: identity rows, zero bias.
    for l in range(L):
        a = np.zeros((C, D_in), np.float32)
        a[np.arange(C), np.arange(C) * L + l] = 1.0
        A_list.append(jnp.asarray(a))
        d_list.append(jnp.zeros((C,), jnp.float32))
    # DAG nodes: Conv1d(kernel_size=kv) over gathered parents == affine map.
    for i, (_, parents) in enumerate(node_list):
        W = weights[i].astype(jnp.float32)          # (C_out, C_in, kv)
        b = biases[i].astype(jnp.float32)           # (C_out,)
        A_m = jnp.zeros((C, D_in), jnp.float32)
        d_m = b
        for t, j in enumerate(parents):
            A_m = A_m + W[:, :, t] @ A_list[j]
            d_m = d_m + W[:, :, t] @ d_list[j]
        A_list.append(A_m)
        d_list.append(d_m)

    A_all = jnp.stack(A_list, axis=0)                                 # (M, C, D_in)
    d_all = jnp.stack(d_list, axis=0)                                 # (M, C)
    A_full = jnp.transpose(A_all, (1, 0, 2)).reshape(C * M, D_in)     # (C*M, D_in)
    b_full = jnp.transpose(d_all, (1, 0)).reshape(1, C * M)           # (1, C*M)
    return A_full.T, b_full, M                                        # W: (D_in, C*M)


def dag_layer_pallas(x, weights, biases, dag):
    """x: (N, C, L) float32 (PyTorch NCL). Returns (N, C, L + len(dag))."""
    N, C, L = x.shape
    W_mat, b_full, M = _compose_affine(dag, weights, biases, C, L)
    D_in, D_out = C * L, C * M

    # Free reshape into the flat layout the kernel uses (no HBM relayout).
    x2 = x.reshape(N, D_in).astype(jnp.float32)

    TN, N_pad = _choose_batch_tile(N, D_in, D_out)
    if N_pad != N:
        x2 = jnp.pad(x2, ((0, N_pad - N), (0, 0)))
    grid = (N_pad // TN,)

    # VMEM budget: double-buffered in/out blocks + (grid-invariant) weights/bias.
    vmem_need = (2 * TN * (D_in + D_out) + 2 * D_in * D_out + 8 * D_out) * 4
    vmem_limit = int(min(48 * 1024 * 1024, max(32 * 1024 * 1024, 2 * vmem_need)))

    # TODO(synk): for very large DAGs (C*M or C*L beyond VMEM) add a second
    # grid axis tiling the C*M output dimension; not needed at these sizes.
    out2 = pl.pallas_call(
        _dag_affine_kernel,
        out_shape=jax.ShapeDtypeStruct((N_pad, D_out), jnp.float32),
        grid=grid,
        in_specs=[
            pl.BlockSpec((TN, D_in), lambda i: (i, 0)),     # batch-tiled input
            pl.BlockSpec((D_in, D_out), lambda i: (0, 0)),  # grid-invariant W
            pl.BlockSpec((1, D_out), lambda i: (0, 0)),     # grid-invariant bias
        ],
        out_specs=pl.BlockSpec((TN, D_out), lambda i: (i, 0)),
        compiler_params=pltpu.CompilerParams(
            dimension_semantics=("parallel",),
            vmem_limit_bytes=vmem_limit),
    )(x2, W_mat, b_full)

    return out2[:N].reshape(N, C, M)


def dag_layer_reference(x, weights, biases, dag):
    """Pure-JAX replica of the PyTorch forward (NCL layout) for verification."""
    out = x
    for i, (_, parents) in enumerate(sorted(dag.items())):
        inp = out[:, :, jnp.array(parents)]                              # (N, C, kv)
        y = jnp.einsum("nit,oit->no", inp, weights[i]) + biases[i]       # (N, C)
        out = jnp.concatenate([out, y[:, :, None]], axis=-1)
    return out


if __name__ == "__main__":
    # Example DAG from the module docstring; nodes 0,1 are leaves.
    dag = {2: [0, 1], 3: [0, 1, 2], 4: [1, 2, 3], 5: [0, 2, 3]}
    in_channels = 8
    batch = 250          # not a multiple of 8/128: exercises padding + slicing
    num_leaves = 2

    key = jax.random.PRNGKey(0)
    kx, *kparams = jax.random.split(key, 1 + 2 * len(dag))

    x = jax.random.normal(kx, (batch, in_channels, num_leaves), dtype=jnp.float32)

    # Deterministic synthetic Conv1d parameters (same shapes/init range as nn.Conv1d).
    weights, biases = [], []
    for i, (_, parents) in enumerate(sorted(dag.items())):
        kv = len(parents)
        bound = 1.0 / np.sqrt(in_channels * kv)
        kw, kb = kparams[2 * i], kparams[2 * i + 1]
        weights.append(jax.random.uniform(
            kw, (in_channels, in_channels, kv), minval=-bound, maxval=bound,
            dtype=jnp.float32))
        biases.append(jax.random.uniform(
            kb, (in_channels,), minval=-bound, maxval=bound, dtype=jnp.float32))

    out = dag_layer_pallas(x, weights, biases, dag)
    out = jax.block_until_ready(out)

    ref = dag_layer_reference(x, weights, biases, dag)
    # Composition changes f32 summation order slightly -> modest tolerance.
    np.testing.assert_allclose(np.asarray(out), np.asarray(ref), rtol=2e-5, atol=2e-5)
    assert out.shape == (batch, in_channels, num_leaves + len(dag))
    print("KERNEL_OK")
</pallas_src>

<mosaic_0001>
module attributes {stable_mosaic.version = 11 : i64} {
  func.func @_dag_affine_kernel(%arg0: i32, %arg1: memref<64x16xf32, #tpu.memory_space<vmem>>, %arg2: memref<16x48xf32, #tpu.memory_space<vmem>>, %arg3: memref<1x48xf32, #tpu.memory_space<vmem>>, %arg4: memref<64x48xf32, #tpu.memory_space<vmem>>) attributes {dimension_semantics = [#tpu.dimension_semantics<parallel>], iteration_bounds = array<i64: 4>, scalar_prefetch = 0 : i64, scratch_operands = 0 : i64, tpu.core_type = #tpu.core_type<tc>, window_params = [{transform_indices = @transform_0, window_bounds = array<i64: 64, 16>}, {pipeline_mode = #tpu.pipeline_mode<synchronous>, transform_indices = @transform_1, window_bounds = array<i64: 16, 48>}, {pipeline_mode = #tpu.pipeline_mode<synchronous>, transform_indices = @transform_2, window_bounds = array<i64: 1, 48>}, {transform_indices = @transform_3, window_bounds = array<i64: 64, 48>}]} {
    %c0 = arith.constant 0 : index
    %c0_0 = arith.constant 0 : index
    %0 = vector.load %arg1[%c0, %c0_0] : memref<64x16xf32, #tpu.memory_space<vmem>>, vector<64x16xf32>
    %c0_1 = arith.constant 0 : index
    %c0_2 = arith.constant 0 : index
    %1 = vector.load %arg2[%c0_1, %c0_2] : memref<16x48xf32, #tpu.memory_space<vmem>>, vector<16x48xf32>
    %cst = arith.constant dense<0.000000e+00> : vector<64x48xf32>
    %2 = tpu.matmul %0, %1, %cst {dimension_numbers = #tpu.dot_dimension_numbers<[1], [0], [0], [1], [0, 0, 1, 1], [], []>} : vector<64x16xf32>, vector<16x48xf32>, vector<64x48xf32> -> vector<64x48xf32>
    %c0_3 = arith.constant 0 : index
    %c0_4 = arith.constant 0 : index
    %3 = vector.load %arg3[%c0_3, %c0_4] : memref<1x48xf32, #tpu.memory_space<vmem>>, vector<1x48xf32>
    %4 = vector.broadcast %3 : vector<1x48xf32> to vector<64x48xf32>
    %5 = arith.addf %2, %4 : vector<64x48xf32>
    %c0_5 = arith.constant 0 : index
    %c0_6 = arith.constant 0 : index
    %6 = vector.load %arg4[%c0_5, %c0_6] : memref<64x48xf32, #tpu.memory_space<vmem>>, vector<64x48xf32>
    tpu.vector_store %arg4[%c0_5, %c0_6], %5 {strides = array<i32>} : memref<64x48xf32, #tpu.memory_space<vmem>>, vector<64x48xf32>,
    return
  }
  func.func @transform_0(%arg0: i32) -> (i32, i32) {
    %c0_i32 = arith.constant 0 : i32
    %c0_i32_0 = arith.constant 0 : i32
    return %arg0, %c0_i32 : i32, i32
  }
  func.func @transform_1(%arg0: i32) -> (i32, i32) {
    %c0_i32 = arith.constant 0 : i32
    %c0_i32_0 = arith.constant 0 : i32
    %c0_i32_1 = arith.constant 0 : i32
    return %c0_i32, %c0_i32_0 : i32, i32
  }
  func.func @transform_2(%arg0: i32) -> (i32, i32) {
    %c0_i32 = arith.constant 0 : i32
    %c0_i32_0 = arith.constant 0 : i32
    %c0_i32_1 = arith.constant 0 : i32
    return %c0_i32, %c0_i32_0 : i32, i32
  }
  func.func @transform_3(%arg0: i32) -> (i32, i32) {
    %c0_i32 = arith.constant 0 : i32
    %c0_i32_0 = arith.constant 0 : i32
    return %arg0, %c0_i32 : i32, i32
  }
}

</mosaic_0001>

<llo_original>
// kernel: tpu_custom_call.1
$region0: #{tpu_custom_call.1}
  #allocation0 [shape = 'u32[]', space=smem, size = 0x4, offset = 0x4, fixed_abs, tag = 'smem constant byte address 0x4 - core index']
  #allocation1 [shape = 'u32[72,128]{1,0:T(1,128)}', space=vmem, size = 0x9000, scoped, tag = 'internal scratch']
  %s0 = inlined_call_operand.vmem [shape: f32[256,16], index: 0, kind: input, shape index: {}]
  %s1 = inlined_call_operand.vmem [shape: f32[16,48], index: 1, kind: input, shape index: {}]
  %s2 = inlined_call_operand.vmem [shape: f32[1,48], index: 2, kind: input, shape index: {}]
  %s3 = inlined_call_operand.vmem [shape: f32[256,48], index: 3, kind: output, shape index: {}]
  %s4 = sld [smem:[#allocation0]]
  $region45: #{tpu_custom_call.1} parent=0
    _
  %s6 = ssub.s32 1, %s4
  %s7 = scalar_select 0, %s6, %s4
  loop: start=0, step=1, limit=6
  $region2: #{tpu_custom_call.1} parent=0 // loop_pre_header
    _
  $region3: #{tpu_custom_call.1} parent=0 // loop_header
    %s9 = sphi 0, %s13
    %p10 = scmp.ge.s32.totalorder %s9, 6
    %s19 = sphi 0, %s21
    %s22 = sphi 0, %s19
    %s23 = sphi 0, %s22
    %s39 = sphi 0, %s23
    %s43 = sphi 0, %s43
    %s45 = sphi 0, %s43
    %s46 = sphi 0, %s45
    %s60 = sphi 0, %s46
    %s64 = sphi 0, %s64
    %s66 = sphi 0, %s64
    %s67 = sphi 0, %s66
    %s81 = sphi 0, %s67
    %s87 = sphi 0, %s89
    %s90 = sphi 0, %s87
    %s91 = sphi 0, %s90
    %s107 = sphi 0, %s91
  $region4: #{tpu_custom_call.1} parent=0 // loop_header_branch
    %12 = sbr.rel (%p10) target = $region8
  $region5: #{tpu_custom_call.1} parent=0 // loop_body
    %s14 = ssub.s32 %s9, 1
    %s15 = ssub.s32 %s9, 2
    %s16 = sadd.s32 %s9, 1
    %s17 = ssub.s32 %s9, %s16
    %p18 = scmp.eq.s32.totalorder %s17, 0
    %s20 = sadd.s32 %s19, 1
    %s21 = scalar_select %p18, %s19, %s20
    %p24 = pneg %p18
    %p25 = scmp.eq.s32.totalorder %s9, 3
    %p26 = por %p24, %p25
    %p27 = scmp.ne.s32.totalorder %s19, %s22
    %p28 = scmp.eq.s32.totalorder %s9, 0
    %p29 = por %p27, %p28
    %p30 = scmp.ne.s32.totalorder %s19, %s22
    %p31 = scmp.eq.s32.totalorder %s14, 3
    %p32 = por %p30, %p31
    %p33 = scmp.ne.s32.totalorder %s22, %s23
    %p34 = scmp.eq.s32.totalorder %s14, 0
    %p35 = por %p33, %p34
    %p36 = scmp.ne.s32.totalorder %s22, %s23
    %p37 = scmp.eq.s32.totalorder %s15, 3
    %p38 = por %p36, %p37
    %p40 = scmp.ne.s32.totalorder %s23, %s39
    %p41 = scmp.eq.s32.totalorder %s15, 0
    %p42 = por %p40, %p41
    %s44 = sadd.s32 %s43, 1
    %p47 = scmp.eq.s32.totalorder %s9, 3
    %p48 = scmp.ne.s32.totalorder %s43, %s45
    %p49 = scmp.eq.s32.totalorder %s9, 0
    %p50 = por %p48, %p49
    %p51 = scmp.ne.s32.totalorder %s43, %s45
    %p52 = scmp.eq.s32.totalorder %s14, 3
    %p53 = por %p51, %p52
    %p54 = scmp.ne.s32.totalorder %s45, %s46
    %p55 = scmp.eq.s32.totalorder %s14, 0
    %p56 = por %p54, %p55
    %p57 = scmp.ne.s32.totalorder %s45, %s46
    %p58 = scmp.eq.s32.totalorder %s15, 3
    %p59 = por %p57, %p58
    %p61 = scmp.ne.s32.totalorder %s46, %s60
    %p62 = scmp.eq.s32.totalorder %s15, 0
    %p63 = por %p61, %p62
    %s65 = sadd.s32 %s64, 1
    %p68 = scmp.eq.s32.totalorder %s9, 3
    %p69 = scmp.ne.s32.totalorder %s64, %s66
    %p70 = scmp.eq.s32.totalorder %s9, 0
    %p71 = por %p69, %p70
    %p72 = scmp.ne.s32.totalorder %s64, %s66
    %p73 = scmp.eq.s32.totalorder %s14, 3
    %p74 = por %p72, %p73
    %p75 = scmp.ne.s32.totalorder %s66, %s67
    %p76 = scmp.eq.s32.totalorder %s14, 0
    %p77 = por %p75, %p76
    %p78 = scmp.ne.s32.totalorder %s66, %s67
    %p79 = scmp.eq.s32.totalorder %s15, 3
    %p80 = por %p78, %p79
    %p82 = scmp.ne.s32.totalorder %s67, %s81
    %p83 = scmp.eq.s32.totalorder %s15, 0
    %p84 = por %p82, %p83
    %s85 = ssub.s32 %s9, %s16
    %p86 = scmp.eq.s32.totalorder %s85, 0
    %s88 = sadd.s32 %s87, 1
    %s89 = scalar_select %p86, %s87, %s88
    %p92 = pneg %p86
    %p93 = scmp.eq.s32.totalorder %s9, 3
    %p94 = por %p92, %p93
    %p95 = scmp.ne.s32.totalorder %s87, %s90
    %p96 = scmp.eq.s32.totalorder %s9, 0
    %p97 = por %p95, %p96
    %p98 = scmp.ne.s32.totalorder %s87, %s90
    %p99 = scmp.eq.s32.totalorder %s14, 3
    %p100 = por %p98, %p99
    %p101 = scmp.ne.s32.totalorder %s90, %s91
    %p102 = scmp.eq.s32.totalorder %s14, 0
    %p103 = por %p101, %p102
    %p104 = scmp.ne.s32.totalorder %s90, %s91
    %p105 = scmp.eq.s32.totalorder %s15, 3
    %p106 = por %p104, %p105
    %p108 = scmp.ne.s32.totalorder %s91, %s107
    %p109 = scmp.eq.s32.totalorder %s15, 0
    %p110 = por %p108, %p109
    %p111 = scmp.le.s32.totalorder 1, %s9
    %p112 = scmp.lt.s32.totalorder %s9, 5
    %p113 = pnand %p111, %p112
    %p114 = pneg %p113
    // Predicated region
    $region9: #{tpu_custom_call.1} parent=5 // pred_check
      _
    $region10: #{tpu_custom_call.1} parent=5 // pred_check_branch
      %116 = sbr.rel (%p113) target = $region12
    $region11: #{tpu_custom_call.1} parent=5 // pred_region
      %s117 = ssub.s32 %s9, 1
      // Predicated region
      $region13: #{tpu_custom_call.1} parent=11 // pred_check
        %p118 = pneg %p56
      $region14: #{tpu_custom_call.1} parent=11 // pred_check_branch
        %120 = sbr.rel (%p118) target = $region16
      $region15: #{tpu_custom_call.1} parent=11 // pred_region
        _
      $region16: #{tpu_custom_call.1} parent=11 // pred_fallthru
        _
      // Predicated region
      $region17: #{tpu_custom_call.1} parent=11 // pred_check
        %p121 = pneg %p77
      $region18: #{tpu_custom_call.1} parent=11 // pred_check_branch
        %123 = sbr.rel (%p121) target = $region20
      $region19: #{tpu_custom_call.1} parent=11 // pred_region
        _
      $region20: #{tpu_custom_call.1} parent=11 // pred_fallthru
        _
    $region12: #{tpu_custom_call.1} parent=5 // pred_fallthru
      _
    %p124 = scmp.lt.s32.totalorder %s9, 4
    // Predicated region
    $region21: #{tpu_custom_call.1} parent=5 // pred_check
      %p125 = pneg %p124
    $region22: #{tpu_custom_call.1} parent=5 // pred_check_branch
      %127 = sbr.rel (%p125) target = $region24
    $region23: #{tpu_custom_call.1} parent=5 // pred_region
      // Predicated region
      $region25: #{tpu_custom_call.1} parent=23 // pred_check
        %p128 = pneg %p29
      $region26: #{tpu_custom_call.1} parent=23 // pred_check_branch
        %130 = sbr.rel (%p128) target = $region28
      $region27: #{tpu_custom_call.1} parent=23 // pred_region
        %s131 = smul.u32 8, %s9
        %p132 = scmp.lt.s32.totalorder %s131, 31
        %s133 = scalar_select %p132, %s131, 31
        %s134 = smul.addr %s133, 8
        %s135 = scalar_lea.vmem %s0, %s134
        %s136 = smul.u32 8, %s9
      $region28: #{tpu_custom_call.1} parent=23 // pred_fallthru
        _
    $region24: #{tpu_custom_call.1} parent=5 // pred_fallthru
      _
    %p137 = scmp.le.s32.totalorder 1, %s9
    %p138 = scmp.lt.s32.totalorder %s9, 5
    %p139 = pnand %p137, %p138
    %p140 = pneg %p139
    // Predicated region
    $region29: #{tpu_custom_call.1} parent=5 // pred_check
      _
    $region30: #{tpu_custom_call.1} parent=5 // pred_check_branch
      %142 = sbr.rel (%p139) target = $region32
    $region31: #{tpu_custom_call.1} parent=5 // pred_region
      %s143 = ssub.s32 %s9, 1
      %s144 = smul.u32 8, %s14
      %p145 = scmp.lt.s32.totalorder %s144, 31
      %s146 = scalar_select %p145, %s144, 31
      %s147 = smul.addr %s146, 8
      %s148 = scalar_lea.vmem %s0, %s147
      %p149 = pneg %p35
      %p150 = pneg %p32
      %p151 = pneg %p56
      %p152 = pneg %p53
      %p153 = pneg %p77
      %p154 = pneg %p74
      %p155 = pneg %p103
      %p156 = pneg %p100
      %s157 = smul.u32 8, %s14
      %p158 = scmp.lt.s32.totalorder %s157, 31
      %s159 = scalar_select %p158, %s157, 31
      %s160 = smul.addr %s159, 8
      %s161 = scalar_lea.vmem %s3, %s160
      %s162 = smul.u32 8, %s14
      %p163 = scmp.lt.s32.totalorder %s162, 31
      %s164 = scalar_select %p163, %s162, 31
      %s165 = smul.addr %s164, 8
      %s166 = scalar_lea.vmem %s0, %s165
      %s167 = smul.u32 8, %s14
      %s168 = smul.u32 8, %s14
      %p169 = scmp.lt.s32.totalorder %s168, 31
      %s170 = scalar_select %p169, %s168, 31
      %s171 = smul.addr %s170, 8
      %s172 = scalar_lea.vmem %s3, %s171
      %s173 = smul.u32 8, %s14
      %v174 = vld [vmem:[%s166] sm:$0xff]
      %v175 = vld [vmem:[%s166 + $0x8] sm:$0xff]
      %v176 = vld [vmem:[%s166 + $0x10] sm:$0xff]
      %v177 = vld [vmem:[%s166 + $0x18] sm:$0xff]
      %v178 = vld [vmem:[%s166 + $0x20] sm:$0xff]
      %v179 = vld [vmem:[%s166 + $0x28] sm:$0xff]
      %v180 = vld [vmem:[%s166 + $0x30] sm:$0xff]
      %v181 = vld [vmem:[%s166 + $0x38] sm:$0xff]
      %v182 = vld [vmem:[%s1] sm:$0xff]
      %v183 = vld [vmem:[%s1 + $0x8] sm:$0xff]
      %v184 = vld [vmem:[%s2] sm:$0x1]
      %v186 = vperm.slane %v184, 0
      %vm188 = vcmask 130048
      %v190 = vsel %vm188, %v174, 0
      %v193 = vsel %vm188, %v175, 0
      %v196 = vsel %vm188, %v176, 0
      %v199 = vsel %vm188, %v177, 0
      %v202 = vsel %vm188, %v178, 0
      %v205 = vsel %vm188, %v179, 0
      %v208 = vsel %vm188, %v180, 0
      %v211 = vsel %vm188, %v181, 0
      %213 = vmatpush.msra.mxu0 0.0
      %214 = vmatpush.msra.mxu0 0.0
      %215 = vmatpush.msra.mxu0 0.0
      %216 = vmatpush.msra.mxu0 0.0
      %217 = vmatpush.msra.mxu0 0.0
      %218 = vmatpush.msra.mxu0 0.0
      %219 = vmatpush.msra.mxu0 0.0
      %220 = vmatpush.msra.mxu0 0.0
      %221 = vmatpush.msra.mxu0 0.0
      %222 = vmatpush.msra.mxu0 0.0
      %223 = vmatpush.msra.mxu0 0.0
      %224 = vmatpush.msra.mxu0 0.0
      %225 = vmatpush.msra.mxu0 0.0
      %226 = vmatpush.msra.mxu0 0.0
      %227 = vmatpush.msra.mxu0 %v183
      %228 = vmatpush.msra.mxu0 %v182
      %229 = vmatmul.f32.gmra.mxu0 %v190
      %v230 = vpop.f32.mrf.mxu0
      %v231 = vadd.f32 %v186, %v230
      %232 = vmatmul.f32.gmra.mxu0 %v193
      %v233 = vpop.f32.mrf.mxu0
      %v234 = vadd.f32 %v186, %v233
      %235 = vmatmul.f32.gmra.mxu0 %v196
      %v236 = vpop.f32.mrf.mxu0
      %v237 = vadd.f32 %v186, %v236
      %238 = vmatmul.f32.gmra.mxu0 %v199
      %v239 = vpop.f32.mrf.mxu0
      %v240 = vadd.f32 %v186, %v239
      %241 = vmatmul.f32.gmra.mxu0 %v202
      %v242 = vpop.f32.mrf.mxu0
      %v243 = vadd.f32 %v186, %v242
      %244 = vmatmul.f32.gmra.mxu0 %v205
      %v245 = vpop.f32.mrf.mxu0
      %v246 = vadd.f32 %v186, %v245
      %247 = vmatmul.f32.gmra.mxu0 %v208
      %v248 = vpop.f32.mrf.mxu0
      %v249 = vadd.f32 %v186, %v248
      %250 = vmatmul.f32.gmra.mxu0 %v211
      %v251 = vpop.f32.mrf.mxu0
      %v252 = vadd.f32 %v186, %v251
      %253 = vdwg.mxu0
      %vm254 = vcmask 392192
      %255 = vst.msk [vmem:[%s172] sm:$0xff] %vm254, %v231
      %256 = vst.msk [vmem:[%s172 + $0x8] sm:$0xff] %vm254, %v234
      %257 = vst.msk [vmem:[%s172 + $0x10] sm:$0xff] %vm254, %v237
      %258 = vst.msk [vmem:[%s172 + $0x18] sm:$0xff] %vm254, %v240
      %259 = vst.msk [vmem:[%s172 + $0x20] sm:$0xff] %vm254, %v243
      %260 = vst.msk [vmem:[%s172 + $0x28] sm:$0xff] %vm254, %v246
      %261 = vst.msk [vmem:[%s172 + $0x30] sm:$0xff] %vm254, %v249
      %262 = vst.msk [vmem:[%s172 + $0x38] sm:$0xff] %vm254, %v252
      %s263 = smul.u32 8, %s14
      %p264 = scmp.lt.s32.totalorder %s263, 31
      %s265 = scalar_select %p264, %s263, 31
      %s266 = smul.addr %s265, 8
      %s267 = scalar_lea.vmem %s3, %s266
      // Predicated region
      $region33: #{tpu_custom_call.1} parent=31 // pred_check
        %p268 = pneg %p100
      $region34: #{tpu_custom_call.1} parent=31 // pred_check_branch
        %270 = sbr.rel (%p268) target = $region36
      $region35: #{tpu_custom_call.1} parent=31 // pred_region
        %s271 = smul.u32 8, %s14
      $region36: #{tpu_custom_call.1} parent=31 // pred_fallthru
        _
    $region32: #{tpu_custom_call.1} parent=5 // pred_fallthru
      _
    %p272 = scmp.le.s32.totalorder 2, %s9
    // Predicated region
    $region37: #{tpu_custom_call.1} parent=5 // pred_check
      %p273 = pneg %p272
    $region38: #{tpu_custom_call.1} parent=5 // pred_check_branch
      %275 = sbr.rel (%p273) target = $region40
    $region39: #{tpu_custom_call.1} parent=5 // pred_region
      %s276 = ssub.s32 %s9, 2
      // Predicated region
      $region41: #{tpu_custom_call.1} parent=39 // pred_check
        %p277 = pneg %p106
      $region42: #{tpu_custom_call.1} parent=39 // pred_check_branch
        %279 = sbr.rel (%p277) target = $region44
      $region43: #{tpu_custom_call.1} parent=39 // pred_region
        %s280 = smul.u32 8, %s15
        %p281 = scmp.lt.s32.totalorder %s280, 31
        %s282 = scalar_select %p281, %s280, 31
        %s283 = smul.addr %s282, 8
        %s284 = scalar_lea.vmem %s3, %s283
      $region44: #{tpu_custom_call.1} parent=39 // pred_fallthru
        _
    $region40: #{tpu_custom_call.1} parent=5 // pred_fallthru
      _
  $region6: #{tpu_custom_call.1} parent=0 // loop_footer
    %s13 = sadd.s32 1, %s9
  $region7: #{tpu_custom_call.1} parent=0 // loop_footer_branch
    %8 = sbr.rel target = $region3
  $region8: #{tpu_custom_call.1} parent=0 // loop_exit
    _

</llo_original>
